<compile_context>
chip_gen: v5e
topology: v5e:2x2
jax: 0.10.0
libtpu: 0.0.40
codegen_flags: <defaults>
</compile_context>

<pallas_src>
import numpy as np
import jax
import jax.numpy as jnp
from jax import lax
from jax.experimental import pallas as pl
from jax.experimental.pallas import tpu as pltpu

LEAKY_ALPHA = 0.2
_F32 = jnp.float32
_BF16 = jnp.bfloat16


def _round_up(x, m):
    return ((x + m - 1) // m) * m


def _vmem_capacity_bytes():
    try:
        return int(pltpu.get_tpu_info().vmem_capacity_bytes)
    except Exception:
        return 64 * 1024 * 1024  # conservative default (v7x per-TC VMEM)


# ---------------------------------------------------------------------------
# Kernel 1: shared projections, tiled over the unique-node dimension M.
#   hA = emb_bal   @ Wp   (cols 0:F = h1b, cols F:2F = h2u)    -> bf16
#   hB = emb_unbal @ Wp   (cols 0:F = h2b, cols F:2F = h1u)    -> bf16
#   dA = A4 · hA^T  (rows: d1b, d2u, u1b, -, 0...)             -> f32
#   dB = A4 · hB^T  (rows: d2b, d1u, -, u1u, 0...)             -> f32
# ---------------------------------------------------------------------------
def _projection_kernel(emb_b_ref, emb_u_ref, w_ref, a4_ref,
                       hA_ref, hB_ref, dA_ref, dB_ref):
    w = w_ref[...]
    hA = jnp.dot(emb_b_ref[...], w, preferred_element_type=_F32)   # (TM, Fp)
    hB = jnp.dot(emb_u_ref[...], w, preferred_element_type=_F32)
    hA_ref[...] = hA.astype(_BF16)
    hB_ref[...] = hB.astype(_BF16)
    a4 = a4_ref[...]                                               # (8, Fp)
    dims = (((1,), (1,)), ((), ()))                                # contract feature axis
    dA_ref[...] = lax.dot_general(a4, hA, dims, preferred_element_type=_F32)  # (8, TM)
    dB_ref[...] = lax.dot_general(a4, hB, dims, preferred_element_type=_F32)


# ---------------------------------------------------------------------------
# Kernel 2: fused two-head masked attention, tiled over the batch dimension N.
# Per grid step: two (TN, M) int8 mask slabs stream in; hA/hB/dA/dB are resident
# (constant block index, single-buffered).
# ---------------------------------------------------------------------------
def _attention_kernel(m1_ref, m2_ref, s_ref, dA_ref, dB_ref, hA_ref, hB_ref,
                      out_bal_ref, out_unbal_ref):
    m1f = m1_ref[...].astype(_F32)                     # (TN, M)
    m2f = m2_ref[...].astype(_F32)
    big = jnp.float32(1e30)
    bias1 = (m1f - 1.0) * big                          # 0 on edges, -1e30 elsewhere
    bias2 = (m2f - 1.0) * big
    s = s_ref[...]                                     # (TN, 2): col0 bal, col1 unbal
    hA = hA_ref[...]                                   # (M, Fp) bf16
    hB = hB_ref[...]

    def head(s_col, d1, d2, hx, hy, out_ref):
        # e[i, j] = leakyrelu(s[i] + d[j]) + mask_bias  -- pure VPU, no matmul, no selects.
        e1 = s_col + d1                                # (TN,1) + (1,M) -> (TN, M)
        e2 = s_col + d2
        e1 = jnp.where(e1 > 0, e1, LEAKY_ALPHA * e1) + bias1
        e2 = jnp.where(e2 > 0, e2, LEAKY_ALPHA * e2) + bias2
        mx = jnp.maximum(jnp.max(e1, axis=-1, keepdims=True),
                         jnp.max(e2, axis=-1, keepdims=True))
        p1 = jnp.exp(e1 - mx) * m1f                    # `* mask` kept: fully padded rows
        p2 = jnp.exp(e2 - mx) * m2f
        denom = jnp.sum(p1, axis=-1, keepdims=True) + jnp.sum(p2, axis=-1, keepdims=True)
        inv = pl.reciprocal(jnp.maximum(denom, jnp.float32(1e-30)), approx=True)
        num = (jnp.dot(p1.astype(_BF16), hx, preferred_element_type=_F32)
               + jnp.dot(p2.astype(_BF16), hy, preferred_element_type=_F32))
        out_ref[...] = num * inv

    # head "bal":   valid result columns 0:F   (p1@h1b + p2@h2b)
    head(s[:, 0:1], dA_ref[0:1, :], dB_ref[0:1, :], hA, hB, out_bal_ref)
    # head "unbal": valid result columns F:2F  (p1@h1u + p2@h2u)
    head(s[:, 1:2], dB_ref[1:2, :], dA_ref[1:2, :], hB, hA, out_unbal_ref)


# ---------------------------------------------------------------------------
# Host wrapper: padding/packing, projection call, tiled attention call, unpad.
# ---------------------------------------------------------------------------
def snea_non_first_layer_attention(emb_bal, emb_unbal, self_idx,
                                   mask_bal_self, mask_unbal,
                                   w_bal, a_bal, w_unbal, a_unbal):
    """Fused two-head SNEA attention. Returns (x_bal, x_unbal), each (N, F)."""
    m, d = emb_bal.shape
    n = mask_bal_self.shape[0]
    f = w_bal.shape[1]

    d_pad = _round_up(d, 128)
    fpack = _round_up(2 * f, 128)           # both heads packed along the lane dimension
    m_pad0 = _round_up(m, 128)
    tm = min(m_pad0, 512)
    m_pad = _round_up(m_pad0, tm)

    vmem_cap = _vmem_capacity_bytes()
    vmem_limit = min(int(vmem_cap * 0.75), 100 * 1024 * 1024)

    def padf(x, r, c):
        x = jnp.asarray(x, _F32)
        return jnp.pad(x, ((0, r - x.shape[0]), (0, c - x.shape[1])))

    def padi8(x, r, c):
        x = jnp.asarray(x, jnp.int8)
        return jnp.pad(x, ((0, r - x.shape[0]), (0, c - x.shape[1])))

    emb_b = padf(emb_bal, m_pad, d_pad)
    emb_u = padf(emb_unbal, m_pad, d_pad)

    # Pack both heads' projection weights column-wise.
    w_pack = jnp.zeros((d_pad, fpack), _F32)
    w_pack = w_pack.at[:d, 0:f].set(jnp.asarray(w_bal, _F32))
    w_pack = w_pack.at[:d, f:2 * f].set(jnp.asarray(w_unbal, _F32))

    # Packed attention vectors (rows 0/1: a_dst bal/unbal, rows 2/3: a_src bal/unbal).
    a_bal = jnp.asarray(a_bal, _F32)
    a_unbal = jnp.asarray(a_unbal, _F32)
    a4 = jnp.zeros((8, fpack), _F32)
    a4 = a4.at[0, 0:f].set(a_bal[f:])
    a4 = a4.at[1, f:2 * f].set(a_unbal[f:])
    a4 = a4.at[2, 0:f].set(a_bal[:f])
    a4 = a4.at[3, f:2 * f].set(a_unbal[:f])

    def resident(shape):
        return pl.BlockSpec(shape, lambda i: (0, 0), pipeline_mode=pl.Buffered(1))

    # --- projection call (grid over M tiles) ---
    proj_step_bytes = (2 * 2 * tm * d_pad * 4        # emb tiles, double-buffered
                       + 2 * d_pad * fpack * 4       # Wp (budgeted at 2 bufs)
                       + 2 * 8 * fpack * 4           # A4
                       + 2 * 2 * tm * fpack * 2      # bf16 h outputs
                       + 2 * 2 * 8 * tm * 4)         # d outputs
    proj_vmem = min(max(proj_step_bytes + (4 << 20), 16 << 20), int(vmem_cap * 0.9))

    hA, hB, dA, dB = pl.pallas_call(
        _projection_kernel,
        out_shape=(jax.ShapeDtypeStruct((m_pad, fpack), _BF16),
                   jax.ShapeDtypeStruct((m_pad, fpack), _BF16),
                   jax.ShapeDtypeStruct((8, m_pad), _F32),
                   jax.ShapeDtypeStruct((8, m_pad), _F32)),
        grid=(m_pad // tm,),
        in_specs=[pl.BlockSpec((tm, d_pad), lambda i: (i, 0)),
                  pl.BlockSpec((tm, d_pad), lambda i: (i, 0)),
                  resident((d_pad, fpack)),
                  resident((8, fpack))],
        out_specs=(pl.BlockSpec((tm, fpack), lambda i: (i, 0)),
                   pl.BlockSpec((tm, fpack), lambda i: (i, 0)),
                   pl.BlockSpec((8, tm), lambda i: (0, i)),
                   pl.BlockSpec((8, tm), lambda i: (0, i))),
        compiler_params=pltpu.CompilerParams(
            dimension_semantics=("parallel",),
            vmem_limit_bytes=int(proj_vmem)),
    )(emb_b, emb_u, w_pack, a4)

    # --- derive TN from the attention kernel's VMEM budget ---
    resident_bytes = 2 * (m_pad * fpack * 2) * 2 + 2 * (8 * m_pad * 4) * 2   # conservative 2x
    per_row_bytes = (2 * 2 * m_pad * 1          # two int8 mask tiles, double-buffered
                     + 2 * 128 * 4              # s tile (lane-padded), double-buffered
                     + 2 * 2 * fpack * 4)       # two f32 output tiles, double-buffered
    budget = vmem_limit - resident_bytes - (6 << 20)
    tn = max(32, min(1024, (budget // per_row_bytes) // 32 * 32))
    tn = min(tn, max(32, _round_up(n, 32)))
    # v7x has two TensorCores; give the "parallel" grid axis at least two steps when possible.
    if n > 32 and -(-n // tn) < 2:
        tn = max(32, _round_up(-(-n // 2), 32))
    n_pad = _round_up(n, tn)
    attn_needed = resident_bytes + tn * per_row_bytes + (6 << 20)
    attn_vmem = min(max(vmem_limit, attn_needed), int(vmem_cap * 0.9))

    m1 = padi8(mask_bal_self, n_pad, m_pad)
    m2 = padi8(mask_unbal, n_pad, m_pad)

    # Per-batch-row source term s[i] = <a_src, W x_self_i>: gather the precomputed
    # per-unique-node rows (dA row 2 / dB row 3) at the self indices (host gather).
    self_idx = jnp.asarray(self_idx, jnp.int32)
    s_bal = jnp.take(dA[2, :], self_idx)
    s_unbal = jnp.take(dB[3, :], self_idx)
    s_pack = jnp.zeros((n_pad, 2), _F32)
    s_pack = s_pack.at[:n, 0].set(s_bal).at[:n, 1].set(s_unbal)

    def tile_rows(last):
        return pl.BlockSpec((tn, last), lambda i: (i, 0))

    x_bal, x_unbal = pl.pallas_call(
        _attention_kernel,
        out_shape=(jax.ShapeDtypeStruct((n_pad, fpack), _F32),
                   jax.ShapeDtypeStruct((n_pad, fpack), _F32)),
        grid=(n_pad // tn,),
        in_specs=[tile_rows(m_pad), tile_rows(m_pad), tile_rows(2),
                  resident((8, m_pad)), resident((8, m_pad)),
                  resident((m_pad, fpack)), resident((m_pad, fpack))],
        out_specs=(tile_rows(fpack), tile_rows(fpack)),
        compiler_params=pltpu.CompilerParams(
            dimension_semantics=("parallel",),          # megacore sharding on v7x
            vmem_limit_bytes=int(attn_vmem)),
    )(m1, m2, s_pack, dA, dB, hA, hB)

    return x_bal[:n, 0:f], x_unbal[:n, f:2 * f]


class NonFirstLayerAggregatorPallas:
    """JAX/Pallas port of SNEA.aggregators.NonFirstLayerAggregator (nheads=1)."""

    def __init__(self, feature_table, in_feat_dim=32, out_feat_dim=32, seed=0):
        # feature_table: (2, num_total_nodes, in_feat_dim) = stacked [balanced, unbalanced]
        # embeddings, i.e. what `self.features(LongTensor(ids))` returns in the torch module.
        self.feature_table = feature_table
        key = jax.random.PRNGKey(seed)
        k1, k2, k3, k4 = jax.random.split(key, 4)
        gain = 1.414
        std_w = gain * (2.0 / (in_feat_dim + out_feat_dim)) ** 0.5
        std_a = gain * (2.0 / (1 + 2 * out_feat_dim)) ** 0.5
        self.w_bal = std_w * jax.random.normal(k1, (in_feat_dim, out_feat_dim), _F32)
        self.a_bal = std_a * jax.random.normal(k2, (2 * out_feat_dim,), _F32)
        self.w_unbal = std_w * jax.random.normal(k3, (in_feat_dim, out_feat_dim), _F32)
        self.a_unbal = std_a * jax.random.normal(k4, (2 * out_feat_dim,), _F32)

    def forward(self, nodes, to_neighs_pos, to_neighs_neg, num_sample=None):
        # num_sample=None path of the reference (no sampling).
        samp_pos = to_neighs_pos
        samp_neg = to_neighs_neg
        self_nodes = [set([nodes[i]]) for i in range(len(nodes))]
        unique_nodes_list = list(set.union(*samp_pos).union(*samp_neg).union(*self_nodes))
        unique_nodes = {nd: i for i, nd in enumerate(unique_nodes_list)}

        n = len(nodes)
        m = len(unique_nodes_list)
        mask_bal_self = np.zeros((n, m), np.int8)   # adj_self ∪ adj_bal
        mask_unbal = np.zeros((n, m), np.int8)      # adj_unbal
        self_idx = np.zeros((n,), np.int32)
        for i in range(n):
            j = unique_nodes[nodes[i]]
            self_idx[i] = j
            mask_bal_self[i, j] = 1
            for nb in samp_pos[i]:
                mask_bal_self[i, unique_nodes[nb]] = 1
            for nb in samp_neg[i]:
                mask_unbal[i, unique_nodes[nb]] = 1

        idx = jnp.asarray(unique_nodes_list, jnp.int32)
        embed = self.feature_table[:, idx, :]          # (2, M, D)
        emb_bal = embed[0].astype(_F32)
        emb_unbal = embed[1].astype(_F32)

        x_bal, x_unbal = snea_non_first_layer_attention(
            emb_bal, emb_unbal, jnp.asarray(self_idx),
            jnp.asarray(mask_bal_self), jnp.asarray(mask_unbal),
            self.w_bal, self.a_bal, self.w_unbal, self.a_unbal)
        return x_bal, x_unbal


if __name__ == "__main__":
    total_nodes = 16
    in_feat_dim = 32
    out_feat_dim = 32
    batch = list(range(8))

    # Deterministic small signed graph: positive and negative neighbor sets per batch node.
    to_neighs_pos = [set([(i + 1) % total_nodes, (i + 2) % total_nodes]) for i in batch]
    to_neighs_neg = [set([(i + 5) % total_nodes, (i + 9) % total_nodes]) for i in batch]

    key = jax.random.PRNGKey(0)
    feature_table = jax.random.normal(key, (2, total_nodes, in_feat_dim), _F32)

    agg = NonFirstLayerAggregatorPallas(feature_table,
                                        in_feat_dim=in_feat_dim,
                                        out_feat_dim=out_feat_dim,
                                        seed=0)
    x_bal, x_unbal = agg.forward(batch, to_neighs_pos, to_neighs_neg, num_sample=None)
    jax.block_until_ready((x_bal, x_unbal))
    assert x_bal.shape == (len(batch), out_feat_dim)
    assert x_unbal.shape == (len(batch), out_feat_dim)
    assert bool(jnp.all(jnp.isfinite(x_bal))) and bool(jnp.all(jnp.isfinite(x_unbal)))
    print("KERNEL_OK")
</pallas_src>

<mosaic_0001>
module attributes {stable_mosaic.version = 11 : i64} {
  func.func @_projection_kernel(%arg0: i32, %arg1: memref<128x128xf32, #tpu.memory_space<vmem>>, %arg2: memref<128x128xf32, #tpu.memory_space<vmem>>, %arg3: memref<128x128xf32, #tpu.memory_space<vmem>>, %arg4: memref<8x128xf32, #tpu.memory_space<vmem>>, %arg5: memref<128x128xbf16, #tpu.memory_space<vmem>>, %arg6: memref<128x128xbf16, #tpu.memory_space<vmem>>, %arg7: memref<8x128xf32, #tpu.memory_space<vmem>>, %arg8: memref<8x128xf32, #tpu.memory_space<vmem>>) attributes {dimension_semantics = [#tpu.dimension_semantics<parallel>], iteration_bounds = array<i64: 1>, scalar_prefetch = 0 : i64, scratch_operands = 0 : i64, tpu.core_type = #tpu.core_type<tc>, window_params = [{transform_indices = @transform_0, window_bounds = array<i64: 128, 128>}, {transform_indices = @transform_1, window_bounds = array<i64: 128, 128>}, {pipeline_mode = #tpu.pipeline_mode<synchronous>, transform_indices = @transform_2, window_bounds = array<i64: 128, 128>}, {pipeline_mode = #tpu.pipeline_mode<synchronous>, transform_indices = @transform_3, window_bounds = array<i64: 8, 128>}, {transform_indices = @transform_4, window_bounds = array<i64: 128, 128>}, {transform_indices = @transform_5, window_bounds = array<i64: 128, 128>}, {transform_indices = @transform_6, window_bounds = array<i64: 8, 128>}, {transform_indices = @transform_7, window_bounds = array<i64: 8, 128>}]} {
    %c0 = arith.constant 0 : index
    %c0_0 = arith.constant 0 : index
    %0 = vector.load %arg3[%c0, %c0_0] : memref<128x128xf32, #tpu.memory_space<vmem>>, vector<128x128xf32>
    %c0_1 = arith.constant 0 : index
    %c0_2 = arith.constant 0 : index
    %1 = vector.load %arg1[%c0_1, %c0_2] : memref<128x128xf32, #tpu.memory_space<vmem>>, vector<128x128xf32>
    %cst = arith.constant dense<0.000000e+00> : vector<128x128xf32>
    %2 = tpu.matmul %1, %0, %cst {dimension_numbers = #tpu.dot_dimension_numbers<[1], [0], [0], [1], [0, 0, 1, 1], [], []>} : vector<128x128xf32>, vector<128x128xf32>, vector<128x128xf32> -> vector<128x128xf32>
    %c0_3 = arith.constant 0 : index
    %c0_4 = arith.constant 0 : index
    %3 = vector.load %arg2[%c0_3, %c0_4] : memref<128x128xf32, #tpu.memory_space<vmem>>, vector<128x128xf32>
    %cst_5 = arith.constant dense<0.000000e+00> : vector<128x128xf32>
    %4 = tpu.matmul %3, %0, %cst_5 {dimension_numbers = #tpu.dot_dimension_numbers<[1], [0], [0], [1], [0, 0, 1, 1], [], []>} : vector<128x128xf32>, vector<128x128xf32>, vector<128x128xf32> -> vector<128x128xf32>
    %5 = arith.truncf %2 : vector<128x128xf32> to vector<128x128xbf16>
    %c0_6 = arith.constant 0 : index
    %c0_7 = arith.constant 0 : index
    %6 = vector.load %arg5[%c0_6, %c0_7] : memref<128x128xbf16, #tpu.memory_space<vmem>>, vector<128x128xbf16>
    tpu.vector_store %arg5[%c0_6, %c0_7], %5 {strides = array<i32>} : memref<128x128xbf16, #tpu.memory_space<vmem>>, vector<128x128xbf16>,
    %7 = arith.truncf %4 : vector<128x128xf32> to vector<128x128xbf16>
    %c0_8 = arith.constant 0 : index
    %c0_9 = arith.constant 0 : index
    %8 = vector.load %arg6[%c0_8, %c0_9] : memref<128x128xbf16, #tpu.memory_space<vmem>>, vector<128x128xbf16>
    tpu.vector_store %arg6[%c0_8, %c0_9], %7 {strides = array<i32>} : memref<128x128xbf16, #tpu.memory_space<vmem>>, vector<128x128xbf16>,
    %c0_10 = arith.constant 0 : index
    %c0_11 = arith.constant 0 : index
    %9 = vector.load %arg4[%c0_10, %c0_11] : memref<8x128xf32, #tpu.memory_space<vmem>>, vector<8x128xf32>
    %cst_12 = arith.constant dense<0.000000e+00> : vector<8x128xf32>
    %10 = tpu.matmul %9, %2, %cst_12 {dimension_numbers = #tpu.dot_dimension_numbers<[1], [1], [0], [0], [0, 0, 1, 0], [], []>} : vector<8x128xf32>, vector<128x128xf32>, vector<8x128xf32> -> vector<8x128xf32>
    %c0_13 = arith.constant 0 : index
    %c0_14 = arith.constant 0 : index
    %11 = vector.load %arg7[%c0_13, %c0_14] : memref<8x128xf32, #tpu.memory_space<vmem>>, vector<8x128xf32>
    tpu.vector_store %arg7[%c0_13, %c0_14], %10 {strides = array<i32>} : memref<8x128xf32, #tpu.memory_space<vmem>>, vector<8x128xf32>,
    %cst_15 = arith.constant dense<0.000000e+00> : vector<8x128xf32>
    %12 = tpu.matmul %9, %4, %cst_15 {dimension_numbers = #tpu.dot_dimension_numbers<[1], [1], [0], [0], [0, 0, 1, 0], [], []>} : vector<8x128xf32>, vector<128x128xf32>, vector<8x128xf32> -> vector<8x128xf32>
    %c0_16 = arith.constant 0 : index
    %c0_17 = arith.constant 0 : index
    %13 = vector.load %arg8[%c0_16, %c0_17] : memref<8x128xf32, #tpu.memory_space<vmem>>, vector<8x128xf32>
    tpu.vector_store %arg8[%c0_16, %c0_17], %12 {strides = array<i32>} : memref<8x128xf32, #tpu.memory_space<vmem>>, vector<8x128xf32>,
    return
  }
  func.func @transform_0(%arg0: i32) -> (i32, i32) {
    %c0_i32 = arith.constant 0 : i32
    %c0_i32_0 = arith.constant 0 : i32
    return %arg0, %c0_i32 : i32, i32
  }
  func.func @transform_1(%arg0: i32) -> (i32, i32) {
    %c0_i32 = arith.constant 0 : i32
    %c0_i32_0 = arith.constant 0 : i32
    return %arg0, %c0_i32 : i32, i32
  }
  func.func @transform_2(%arg0: i32) -> (i32, i32) {
    %c0_i32 = arith.constant 0 : i32
    %c0_i32_0 = arith.constant 0 : i32
    %c0_i32_1 = arith.constant 0 : i32
    return %c0_i32, %c0_i32_0 : i32, i32
  }
  func.func @transform_3(%arg0: i32) -> (i32, i32) {
    %c0_i32 = arith.constant 0 : i32
    %c0_i32_0 = arith.constant 0 : i32
    %c0_i32_1 = arith.constant 0 : i32
    return %c0_i32, %c0_i32_0 : i32, i32
  }
  func.func @transform_4(%arg0: i32) -> (i32, i32) {
    %c0_i32 = arith.constant 0 : i32
    %c0_i32_0 = arith.constant 0 : i32
    return %arg0, %c0_i32 : i32, i32
  }
  func.func @transform_5(%arg0: i32) -> (i32, i32) {
    %c0_i32 = arith.constant 0 : i32
    %c0_i32_0 = arith.constant 0 : i32
    return %arg0, %c0_i32 : i32, i32
  }
  func.func @transform_6(%arg0: i32) -> (i32, i32) {
    %c0_i32 = arith.constant 0 : i32
    %c0_i32_0 = arith.constant 0 : i32
    return %c0_i32, %arg0 : i32, i32
  }
  func.func @transform_7(%arg0: i32) -> (i32, i32) {
    %c0_i32 = arith.constant 0 : i32
    %c0_i32_0 = arith.constant 0 : i32
    return %c0_i32, %arg0 : i32, i32
  }
}

</mosaic_0001>

<llo_original>
// kernel: tpu_custom_call.1
$region0: #{tpu_custom_call.1}
  #allocation0 [shape = 'u32[]', space=smem, size = 0x4, offset = 0x4, fixed_abs, tag = 'smem constant byte address 0x4 - core index']
  #allocation1 [shape = 'u32[72,128]{1,0:T(1,128)}', space=vmem, size = 0x9000, scoped, tag = 'internal scratch']
  %s0 = inlined_call_operand.hbm [shape: f32[128,128], index: 0, kind: input, shape index: {}]
  %s1 = inlined_call_operand.hbm [shape: f32[128,128], index: 1, kind: input, shape index: {}]
  %s2 = inlined_call_operand.hbm [shape: f32[128,128], index: 2, kind: input, shape index: {}]
  %s3 = inlined_call_operand.hbm [shape: f32[8,128], index: 3, kind: input, shape index: {}]
  %s4 = inlined_call_operand.hbm [shape: bf16[128,128], index: 4, kind: output, shape index: {0}]
  %s5 = inlined_call_operand.hbm [shape: bf16[128,128], index: 5, kind: output, shape index: {1}]
  %s6 = inlined_call_operand.hbm [shape: f32[8,128], index: 6, kind: output, shape index: {2}]
  %s7 = inlined_call_operand.hbm [shape: f32[8,128], index: 7, kind: output, shape index: {3}]
  %8 = xla_tuple %s4, %s5, %s6, %s7
  %s9 = sld [smem:[#allocation0]]
  $region66: #{tpu_custom_call.1} parent=0
    _
  %s11 = ssub.s32 1, %s9
  %s12 = scalar_select 0, %s11, %s9
  $region1: #{tpu_custom_call.1} parent=0
    #allocation2 [shape = 'u8[65536]{0}', space=vmem, size = 0x10000, scoped, tag = 'input window, operand 0, single buffered']
    #allocation3 [shape = 's32[1]{0}', space=sflag, size = 0x4, scoped, tag = 'scoped memory for tpu_custom_call.1']
    #allocation4 [shape = 's32[1]{0}', space=sflag, size = 0x4, scoped, tag = 'scoped memory for tpu_custom_call.1']
    #allocation5 [shape = 'u8[65536]{0}', space=vmem, size = 0x10000, scoped, tag = 'input window, operand 1, single buffered']
    #allocation6 [shape = 's32[1]{0}', space=sflag, size = 0x4, scoped, tag = 'scoped memory for tpu_custom_call.1']
    #allocation7 [shape = 'u8[65536]{0}', space=vmem, size = 0x10000, scoped, tag = 'input window, operand 2, single buffered']
    #allocation8 [shape = 'u8[4096]{0}', space=vmem, size = 0x1000, scoped, tag = 'input window, operand 3, single buffered']
    #allocation9 [shape = 's32[1]{0}', space=sflag, size = 0x4, scoped, tag = 'scoped memory for tpu_custom_call.1']
    #allocation10 [shape = 'u8[32768]{0}', space=vmem, size = 0x8000, scoped, tag = 'output window, operand 0, single buffered']
    #allocation11 [shape = 'u8[32768]{0}', space=vmem, size = 0x8000, scoped, tag = 'output window, operand 1, single buffered']
    #allocation12 [shape = 's32[1]{0}', space=sflag, size = 0x4, scoped, tag = 'scoped memory for tpu_custom_call.1']
    #allocation13 [shape = 'u8[4096]{0}', space=vmem, size = 0x1000, scoped, tag = 'output window, operand 2, single buffered']
    #allocation14 [shape = 'u8[4096]{0}', space=vmem, size = 0x1000, scoped, tag = 'output window, operand 3, single buffered']
    #allocation15 [shape = 's32[1]{0}', space=sflag, size = 0x4, scoped, tag = 'scoped memory for tpu_custom_call.1']
    %13 = vsyncpa [#allocation3], 0
    %14 = vsyncpa [#allocation6], 0
    %15 = vsyncpa [#allocation9], 0
    %16 = vsyncpa [#allocation4], 0
    %17 = vsyncpa [#allocation12], 0
    %18 = vsyncpa [#allocation15], 0
    // Predicated region
    $region2: #{tpu_custom_call.1} parent=1 // pred_check
      _
    $region3: #{tpu_custom_call.1} parent=1 // pred_check_branch
      %20 = sbr.rel (0) target = $region5
    $region4: #{tpu_custom_call.1} parent=1 // pred_region
      %22 = vsyncadd [#allocation3], 0
      %s23 = sshll.u32 %s0, 4
      %s24 = int_to_ptr.hbm [resolvable:$true] %s23
      %s25 = sshll.u32 [#allocation2], 4
      %s26 = int_to_ptr.vmem [resolvable:$true] %s25
      %31 = dma.hbm_to_vmem [thread:$0]  %s24, 2048, %s26, [#allocation3], 128, 128, 8
    $region5: #{tpu_custom_call.1} parent=1 // pred_fallthru
      _
    // Predicated region
    $region6: #{tpu_custom_call.1} parent=1 // pred_check
      _
    $region7: #{tpu_custom_call.1} parent=1 // pred_check_branch
      %33 = sbr.rel (0) target = $region9
    $region8: #{tpu_custom_call.1} parent=1 // pred_region
      %35 = vsyncadd [#allocation6], 0
      %s36 = sshll.u32 %s1, 4
      %s37 = int_to_ptr.hbm [resolvable:$true] %s36
      %s38 = sshll.u32 [#allocation5], 4
      %s39 = int_to_ptr.vmem [resolvable:$true] %s38
      %44 = dma.hbm_to_vmem [thread:$0]  %s37, 2048, %s39, [#allocation6], 128, 128, 8
    $region9: #{tpu_custom_call.1} parent=1 // pred_fallthru
      _
    // Predicated region
    $region10: #{tpu_custom_call.1} parent=1 // pred_check
      _
    $region11: #{tpu_custom_call.1} parent=1 // pred_check_branch
      %46 = sbr.rel (0) target = $region13
    $region12: #{tpu_custom_call.1} parent=1 // pred_region
      %48 = vsyncadd [#allocation6], 0
      %s49 = sshll.u32 %s2, 4
      %s50 = int_to_ptr.hbm [resolvable:$true] %s49
      %s51 = sshll.u32 [#allocation7], 4
      %s52 = int_to_ptr.vmem [resolvable:$true] %s51
      %57 = dma.hbm_to_vmem [thread:$0]  %s50, 2048, %s52, [#allocation6], 128, 128, 8
    $region13: #{tpu_custom_call.1} parent=1 // pred_fallthru
      _
    // Predicated region
    $region14: #{tpu_custom_call.1} parent=1 // pred_check
      _
    $region15: #{tpu_custom_call.1} parent=1 // pred_check_branch
      %59 = sbr.rel (0) target = $region17
    $region16: #{tpu_custom_call.1} parent=1 // pred_region
      %61 = vsyncadd [#allocation9], 0
      %s63 = sshll.u32 %s3, 4
      %s64 = int_to_ptr.hbm [resolvable:$true] %s63
      %s65 = sshll.u32 [#allocation8], 4
      %s66 = int_to_ptr.vmem [resolvable:$true] %s65
      %68 = dma.hbm_to_vmem [thread:$0]  %s64, 128, %s66, [#allocation9]
    $region17: #{tpu_custom_call.1} parent=1 // pred_fallthru
      _
    // Predicated region
    $region18: #{tpu_custom_call.1} parent=1 // pred_check
      _
    $region19: #{tpu_custom_call.1} parent=1 // pred_check_branch
      %70 = sbr.rel (0) target = $region21
    $region20: #{tpu_custom_call.1} parent=1 // pred_region
      %72 = dma.done [#allocation3], 2048
    $region21: #{tpu_custom_call.1} parent=1 // pred_fallthru
      _
    // Predicated region
    $region22: #{tpu_custom_call.1} parent=1 // pred_check
      _
    $region23: #{tpu_custom_call.1} parent=1 // pred_check_branch
      %74 = sbr.rel (0) target = $region25
    $region24: #{tpu_custom_call.1} parent=1 // pred_region
      %76 = dma.done [#allocation6], 2048
    $region25: #{tpu_custom_call.1} parent=1 // pred_fallthru
      _
    // Predicated region
    $region26: #{tpu_custom_call.1} parent=1 // pred_check
      _
    $region27: #{tpu_custom_call.1} parent=1 // pred_check_branch
      %78 = sbr.rel (0) target = $region29
    $region28: #{tpu_custom_call.1} parent=1 // pred_region
      %80 = dma.done [#allocation6], 2048
    $region29: #{tpu_custom_call.1} parent=1 // pred_fallthru
      _
    // Predicated region
    $region30: #{tpu_custom_call.1} parent=1 // pred_check
      _
    $region31: #{tpu_custom_call.1} parent=1 // pred_check_branch
      %82 = sbr.rel (0) target = $region33
    $region32: #{tpu_custom_call.1} parent=1 // pred_region
      %84 = dma.done [#allocation9], 128
    $region33: #{tpu_custom_call.1} parent=1 // pred_fallthru
      _
    %v85 = vld [vmem:[#allocation7] sm:$0xff]
    %v86 = vld [vmem:[#allocation7 + $0x8] sm:$0xff]
    %v87 = vld [vmem:[#allocation7 + $0x10] sm:$0xff]
    %v88 = vld [vmem:[#allocation7 + $0x18] sm:$0xff]
    %v89 = vld [vmem:[#allocation7 + $0x20] sm:$0xff]
    %v90 = vld [vmem:[#allocation7 + $0x28] sm:$0xff]
    %v91 = vld [vmem:[#allocation7 + $0x30] sm:$0xff]
    %v92 = vld [vmem:[#allocation7 + $0x38] sm:$0xff]
    %v93 = vld [vmem:[#allocation7 + $0x40] sm:$0xff]
    %v94 = vld [vmem:[#allocation7 + $0x48] sm:$0xff]
    %v95 = vld [vmem:[#allocation7 + $0x50] sm:$0xff]
    %v96 = vld [vmem:[#allocation7 + $0x58] sm:$0xff]
    %v97 = vld [vmem:[#allocation7 + $0x60] sm:$0xff]
    %v98 = vld [vmem:[#allocation7 + $0x68] sm:$0xff]
    %v99 = vld [vmem:[#allocation7 + $0x70] sm:$0xff]
    %v100 = vld [vmem:[#allocation7 + $0x78] sm:$0xff]
    %v101 = vld [vmem:[#allocation2] sm:$0xff]
    %v102 = vld [vmem:[#allocation2 + $0x8] sm:$0xff]
    %v103 = vld [vmem:[#allocation2 + $0x10] sm:$0xff]
    %v104 = vld [vmem:[#allocation2 + $0x18] sm:$0xff]
    %v105 = vld [vmem:[#allocation2 + $0x20] sm:$0xff]
    %v106 = vld [vmem:[#allocation2 + $0x28] sm:$0xff]
    %v107 = vld [vmem:[#allocation2 + $0x30] sm:$0xff]
    %v108 = vld [vmem:[#allocation2 + $0x38] sm:$0xff]
    %v109 = vld [vmem:[#allocation2 + $0x40] sm:$0xff]
    %v110 = vld [vmem:[#allocation2 + $0x48] sm:$0xff]
    %v111 = vld [vmem:[#allocation2 + $0x50] sm:$0xff]
    %v112 = vld [vmem:[#allocation2 + $0x58] sm:$0xff]
    %v113 = vld [vmem:[#allocation2 + $0x60] sm:$0xff]
    %v114 = vld [vmem:[#allocation2 + $0x68] sm:$0xff]
    %v115 = vld [vmem:[#allocation2 + $0x70] sm:$0xff]
    %v116 = vld [vmem:[#allocation2 + $0x78] sm:$0xff]
    %117 = vmatpush.msra.mxu0 %v100
    %118 = vmatpush.msra.mxu0 %v99
    %119 = vmatpush.msra.mxu0 %v98
    %120 = vmatpush.msra.mxu0 %v97
    %121 = vmatpush.msra.mxu0 %v96
    %122 = vmatpush.msra.mxu0 %v95
    %123 = vmatpush.msra.mxu0 %v94
    %124 = vmatpush.msra.mxu0 %v93
    %125 = vmatpush.msra.mxu0 %v92
    %126 = vmatpush.msra.mxu0 %v91
    %127 = vmatpush.msra.mxu0 %v90
    %128 = vmatpush.msra.mxu0 %v89
    %129 = vmatpush.msra.mxu0 %v88
    %130 = vmatpush.msra.mxu0 %v87
    %131 = vmatpush.msra.mxu0 %v86
    %132 = vmatpush.msra.mxu0 %v85
    %133 = vmatmul.f32.gmra.mxu0 %v101
    %v134 = vpop.f32.mrf.mxu0
    %v135 = vadd.f32 0.0, %v134
    %136 = vmatmul.f32.gmra.mxu0 %v102
    %v137 = vpop.f32.mrf.mxu0
    %v138 = vadd.f32 0.0, %v137
    %139 = vmatmul.f32.gmra.mxu0 %v103
    %v140 = vpop.f32.mrf.mxu0
    %v141 = vadd.f32 0.0, %v140
    %142 = vmatmul.f32.gmra.mxu0 %v104
    %v143 = vpop.f32.mrf.mxu0
    %v144 = vadd.f32 0.0, %v143
    %145 = vmatmul.f32.gmra.mxu0 %v105
    %v146 = vpop.f32.mrf.mxu0
    %v147 = vadd.f32 0.0, %v146
    %148 = vmatmul.f32.gmra.mxu0 %v106
    %v149 = vpop.f32.mrf.mxu0
    %v150 = vadd.f32 0.0, %v149
    %151 = vmatmul.f32.gmra.mxu0 %v107
    %v152 = vpop.f32.mrf.mxu0
    %v153 = vadd.f32 0.0, %v152
    %154 = vmatmul.f32.gmra.mxu0 %v108
    %v155 = vpop.f32.mrf.mxu0
    %v156 = vadd.f32 0.0, %v155
    %157 = vmatmul.f32.gmra.mxu0 %v109
    %v158 = vpop.f32.mrf.mxu0
    %v159 = vadd.f32 0.0, %v158
    %160 = vmatmul.f32.gmra.mxu0 %v110
    %v161 = vpop.f32.mrf.mxu0
    %v162 = vadd.f32 0.0, %v161
    %163 = vmatmul.f32.gmra.mxu0 %v111
    %v164 = vpop.f32.mrf.mxu0
    %v165 = vadd.f32 0.0, %v164
    %166 = vmatmul.f32.gmra.mxu0 %v112
    %v167 = vpop.f32.mrf.mxu0
    %v168 = vadd.f32 0.0, %v167
    %169 = vmatmul.f32.gmra.mxu0 %v113
    %v170 = vpop.f32.mrf.mxu0
    %v171 = vadd.f32 0.0, %v170
    %172 = vmatmul.f32.gmra.mxu0 %v114
    %v173 = vpop.f32.mrf.mxu0
    %v174 = vadd.f32 0.0, %v173
    %175 = vmatmul.f32.gmra.mxu0 %v115
    %v176 = vpop.f32.mrf.mxu0
    %v177 = vadd.f32 0.0, %v176
    %178 = vmatmul.f32.gmra.mxu0 %v116
    %v179 = vpop.f32.mrf.mxu0
    %v180 = vadd.f32 0.0, %v179
    %181 = vdwg.mxu0
    %v182 = vld [vmem:[#allocation5] sm:$0xff]
    %v183 = vld [vmem:[#allocation5 + $0x8] sm:$0xff]
    %v184 = vld [vmem:[#allocation5 + $0x10] sm:$0xff]
    %v185 = vld [vmem:[#allocation5 + $0x18] sm:$0xff]
    %v186 = vld [vmem:[#allocation5 + $0x20] sm:$0xff]
    %v187 = vld [vmem:[#allocation5 + $0x28] sm:$0xff]
    %v188 = vld [vmem:[#allocation5 + $0x30] sm:$0xff]
    %v189 = vld [vmem:[#allocation5 + $0x38] sm:$0xff]
    %v190 = vld [vmem:[#allocation5 + $0x40] sm:$0xff]
    %v191 = vld [vmem:[#allocation5 + $0x48] sm:$0xff]
    %v192 = vld [vmem:[#allocation5 + $0x50] sm:$0xff]
    %v193 = vld [vmem:[#allocation5 + $0x58] sm:$0xff]
    %v194 = vld [vmem:[#allocation5 + $0x60] sm:$0xff]
    %v195 = vld [vmem:[#allocation5 + $0x68] sm:$0xff]
    %v196 = vld [vmem:[#allocation5 + $0x70] sm:$0xff]
    %v197 = vld [vmem:[#allocation5 + $0x78] sm:$0xff]
    %198 = vmatpush.msra.mxu0 %v100
    %199 = vmatpush.msra.mxu0 %v99
    %200 = vmatpush.msra.mxu0 %v98
    %201 = vmatpush.msra.mxu0 %v97
    %202 = vmatpush.msra.mxu0 %v96
    %203 = vmatpush.msra.mxu0 %v95
    %204 = vmatpush.msra.mxu0 %v94
    %205 = vmatpush.msra.mxu0 %v93
    %206 = vmatpush.msra.mxu0 %v92
    %207 = vmatpush.msra.mxu0 %v91
    %208 = vmatpush.msra.mxu0 %v90
    %209 = vmatpush.msra.mxu0 %v89
    %210 = vmatpush.msra.mxu0 %v88
    %211 = vmatpush.msra.mxu0 %v87
    %212 = vmatpush.msra.mxu0 %v86
    %213 = vmatpush.msra.mxu0 %v85
    %214 = vmatmul.f32.gmra.mxu0 %v182
    %v215 = vpop.f32.mrf.mxu0
    %v216 = vadd.f32 0.0, %v215
    %217 = vmatmul.f32.gmra.mxu0 %v183
    %v218 = vpop.f32.mrf.mxu0
    %v219 = vadd.f32 0.0, %v218
    %220 = vmatmul.f32.gmra.mxu0 %v184
    %v221 = vpop.f32.mrf.mxu0
    %v222 = vadd.f32 0.0, %v221
    %223 = vmatmul.f32.gmra.mxu0 %v185
    %v224 = vpop.f32.mrf.mxu0
    %v225 = vadd.f32 0.0, %v224
    %226 = vmatmul.f32.gmra.mxu0 %v186
    %v227 = vpop.f32.mrf.mxu0
    %v228 = vadd.f32 0.0, %v227
    %229 = vmatmul.f32.gmra.mxu0 %v187
    %v230 = vpop.f32.mrf.mxu0
    %v231 = vadd.f32 0.0, %v230
    %232 = vmatmul.f32.gmra.mxu0 %v188
    %v233 = vpop.f32.mrf.mxu0
    %v234 = vadd.f32 0.0, %v233
    %235 = vmatmul.f32.gmra.mxu0 %v189
    %v236 = vpop.f32.mrf.mxu0
    %v237 = vadd.f32 0.0, %v236
    %238 = vmatmul.f32.gmra.mxu0 %v190
    %v239 = vpop.f32.mrf.mxu0
    %v240 = vadd.f32 0.0, %v239
    %241 = vmatmul.f32.gmra.mxu0 %v191
    %v242 = vpop.f32.mrf.mxu0
    %v243 = vadd.f32 0.0, %v242
    %244 = vmatmul.f32.gmra.mxu0 %v192
    %v245 = vpop.f32.mrf.mxu0
    %v246 = vadd.f32 0.0, %v245
    %247 = vmatmul.f32.gmra.mxu0 %v193
    %v248 = vpop.f32.mrf.mxu0
    %v249 = vadd.f32 0.0, %v248
    %250 = vmatmul.f32.gmra.mxu0 %v194
    %v251 = vpop.f32.mrf.mxu0
    %v252 = vadd.f32 0.0, %v251
    %253 = vmatmul.f32.gmra.mxu0 %v195
    %v254 = vpop.f32.mrf.mxu0
    %v255 = vadd.f32 0.0, %v254
    %256 = vmatmul.f32.gmra.mxu0 %v196
    %v257 = vpop.f32.mrf.mxu0
    %v258 = vadd.f32 0.0, %v257
    %259 = vmatmul.f32.gmra.mxu0 %v197
    %v260 = vpop.f32.mrf.mxu0
    %v261 = vadd.f32 0.0, %v260
    %262 = vdwg.mxu0
    %v263 = vpack.c.bf16 %v135, %v135
    %v264 = vpack.c.bf16 %v138, %v138
    %v265 = vpack.c.bf16 %v141, %v141
    %v266 = vpack.c.bf16 %v144, %v144
    %v267 = vpack.c.bf16 %v147, %v147
    %v268 = vpack.c.bf16 %v150, %v150
    %v269 = vpack.c.bf16 %v153, %v153
    %v270 = vpack.c.bf16 %v156, %v156
    %v271 = vpack.c.bf16 %v159, %v159
    %v272 = vpack.c.bf16 %v162, %v162
    %v273 = vpack.c.bf16 %v165, %v165
    %v274 = vpack.c.bf16 %v168, %v168
    %v275 = vpack.c.bf16 %v171, %v171
    %v276 = vpack.c.bf16 %v174, %v174
    %v277 = vpack.c.bf16 %v177, %v177
    %v278 = vpack.c.bf16 %v180, %v180
    %279 = vst [vmem:[#allocation10] sm:$0xf] %v263
    %280 = vst [vmem:[#allocation10 + $0x4] sm:$0xf] %v264
    %281 = vst [vmem:[#allocation10 + $0x8] sm:$0xf] %v265
    %282 = vst [vmem:[#allocation10 + $0xc] sm:$0xf] %v266
    %283 = vst [vmem:[#allocation10 + $0x10] sm:$0xf] %v267
    %284 = vst [vmem:[#allocation10 + $0x14] sm:$0xf] %v268
    %285 = vst [vmem:[#allocation10 + $0x18] sm:$0xf] %v269
    %286 = vst [vmem:[#allocation10 + $0x1c] sm:$0xf] %v270
    %287 = vst [vmem:[#allocation10 + $0x20] sm:$0xf] %v271
    %288 = vst [vmem:[#allocation10 + $0x24] sm:$0xf] %v272
    %289 = vst [vmem:[#allocation10 + $0x28] sm:$0xf] %v273
    %290 = vst [vmem:[#allocation10 + $0x2c] sm:$0xf] %v274
    %291 = vst [vmem:[#allocation10 + $0x30] sm:$0xf] %v275
    %292 = vst [vmem:[#allocation10 + $0x34] sm:$0xf] %v276
    %293 = vst [vmem:[#allocation10 + $0x38] sm:$0xf] %v277
    %294 = vst [vmem:[#allocation10 + $0x3c] sm:$0xf] %v278
    %v295 = vpack.c.bf16 %v216, %v216
    %v296 = vpack.c.bf16 %v219, %v219
    %v297 = vpack.c.bf16 %v222, %v222
    %v298 = vpack.c.bf16 %v225, %v225
    %v299 = vpack.c.bf16 %v228, %v228
    %v300 = vpack.c.bf16 %v231, %v231
    %v301 = vpack.c.bf16 %v234, %v234
    %v302 = vpack.c.bf16 %v237, %v237
    %v303 = vpack.c.bf16 %v240, %v240
    %v304 = vpack.c.bf16 %v243, %v243
    %v305 = vpack.c.bf16 %v246, %v246
    %v306 = vpack.c.bf16 %v249, %v249
    %v307 = vpack.c.bf16 %v252, %v252
    %v308 = vpack.c.bf16 %v255, %v255
    %v309 = vpack.c.bf16 %v258, %v258
    %v310 = vpack.c.bf16 %v261, %v261
    %311 = vst [vmem:[#allocation11] sm:$0xf] %v295
    %312 = vst [vmem:[#allocation11 + $0x4] sm:$0xf] %v296
    %313 = vst [vmem:[#allocation11 + $0x8] sm:$0xf] %v297
    %314 = vst [vmem:[#allocation11 + $0xc] sm:$0xf] %v298
    %315 = vst [vmem:[#allocation11 + $0x10] sm:$0xf] %v299
    %316 = vst [vmem:[#allocation11 + $0x14] sm:$0xf] %v300
    %317 = vst [vmem:[#allocation11 + $0x18] sm:$0xf] %v301
    %318 = vst [vmem:[#allocation11 + $0x1c] sm:$0xf] %v302
    %319 = vst [vmem:[#allocation11 + $0x20] sm:$0xf] %v303
    %320 = vst [vmem:[#allocation11 + $0x24] sm:$0xf] %v304
    %321 = vst [vmem:[#allocation11 + $0x28] sm:$0xf] %v305
    %322 = vst [vmem:[#allocation11 + $0x2c] sm:$0xf] %v306
    %323 = vst [vmem:[#allocation11 + $0x30] sm:$0xf] %v307
    %324 = vst [vmem:[#allocation11 + $0x34] sm:$0xf] %v308
    %325 = vst [vmem:[#allocation11 + $0x38] sm:$0xf] %v309
    %326 = vst [vmem:[#allocation11 + $0x3c] sm:$0xf] %v310
    %v327 = vld [vmem:[#allocation8] sm:$0xff]
    %328 = vmatpush.xpose.msra.mxu0 %v180
    %329 = vmatpush.xpose.msra.mxu0 %v177
    %330 = vmatpush.xpose.msra.mxu0 %v174
    %331 = vmatpush.xpose.msra.mxu0 %v171
    %332 = vmatpush.xpose.msra.mxu0 %v168
    %333 = vmatpush.xpose.msra.mxu0 %v165
    %334 = vmatpush.xpose.msra.mxu0 %v162
    %335 = vmatpush.xpose.msra.mxu0 %v159
    %336 = vmatpush.xpose.msra.mxu0 %v156
    %337 = vmatpush.xpose.msra.mxu0 %v153
    %338 = vmatpush.xpose.msra.mxu0 %v150
    %339 = vmatpush.xpose.msra.mxu0 %v147
    %340 = vmatpush.xpose.msra.mxu0 %v144
    %341 = vmatpush.xpose.msra.mxu0 %v141
    %342 = vmatpush.xpose.msra.mxu0 %v138
    %343 = vmatpush.xpose.msra.mxu0 %v135
    %344 = vmatmul.f32.gmra.mxu0 %v327
    %v345 = vpop.f32.mrf.mxu0
    %v346 = vadd.f32 0.0, %v345
    %347 = vdwg.mxu0
    %348 = vst [vmem:[#allocation13] sm:$0xff] %v346
    %349 = vmatpush.xpose.msra.mxu0 %v261
    %350 = vmatpush.xpose.msra.mxu0 %v258
    %351 = vmatpush.xpose.msra.mxu0 %v255
    %352 = vmatpush.xpose.msra.mxu0 %v252
    %353 = vmatpush.xpose.msra.mxu0 %v249
    %354 = vmatpush.xpose.msra.mxu0 %v246
    %355 = vmatpush.xpose.msra.mxu0 %v243
    %356 = vmatpush.xpose.msra.mxu0 %v240
    %357 = vmatpush.xpose.msra.mxu0 %v237
    %358 = vmatpush.xpose.msra.mxu0 %v234
    %359 = vmatpush.xpose.msra.mxu0 %v231
    %360 = vmatpush.xpose.msra.mxu0 %v228
    %361 = vmatpush.xpose.msra.mxu0 %v225
    %362 = vmatpush.xpose.msra.mxu0 %v222
    %363 = vmatpush.xpose.msra.mxu0 %v219
    %364 = vmatpush.xpose.msra.mxu0 %v216
    %365 = vmatmul.f32.gmra.mxu0 %v327
    %v366 = vpop.f32.mrf.mxu0
    %v367 = vadd.f32 0.0, %v366
    %368 = vdwg.mxu0
    %369 = vst [vmem:[#allocation14] sm:$0xff] %v367
    // Predicated region
    $region34: #{tpu_custom_call.1} parent=1 // pred_check
      _
    $region35: #{tpu_custom_call.1} parent=1 // pred_check_branch
      %371 = sbr.rel (0) target = $region37
    $region36: #{tpu_custom_call.1} parent=1 // pred_region
      %373 = vsyncadd [#allocation4], 0
      %s374 = sshll.u32 [#allocation10], 4
      %s375 = int_to_ptr.vmem [resolvable:$true] %s374
      %s376 = sshll.u32 %s4, 4
      %s377 = int_to_ptr.hbm [resolvable:$true] %s376
      %382 = dma.vmem_to_hbm [thread:$0]  %s375, 1024, %s377, [#allocation4], 64, 64, 4
    $region37: #{tpu_custom_call.1} parent=1 // pred_fallthru
      _
    // Predicated region
    $region38: #{tpu_custom_call.1} parent=1 // pred_check
      _
    $region39: #{tpu_custom_call.1} parent=1 // pred_check_branch
      %384 = sbr.rel (0) target = $region41
    $region40: #{tpu_custom_call.1} parent=1 // pred_region
      %386 = vsyncadd [#allocation12], 0
      %s387 = sshll.u32 [#allocation11], 4
      %s388 = int_to_ptr.vmem [resolvable:$true] %s387
      %s389 = sshll.u32 %s5, 4
      %s390 = int_to_ptr.hbm [resolvable:$true] %s389
      %395 = dma.vmem_to_hbm [thread:$0]  %s388, 1024, %s390, [#allocation12], 64, 64, 4
    $region41: #{tpu_custom_call.1} parent=1 // pred_fallthru
      _
    // Predicated region
    $region42: #{tpu_custom_call.1} parent=1 // pred_check
      _
    $region43: #{tpu_custom_call.1} parent=1 // pred_check_branch
      %397 = sbr.rel (0) target = $region45
    $region44: #{tpu_custom_call.1} parent=1 // pred_region
      %399 = vsyncadd [#allocation12], 0
      %s401 = sshll.u32 [#allocation13], 4
      %s402 = int_to_ptr.vmem [resolvable:$true] %s401
      %s403 = sshll.u32 %s6, 4
      %s404 = int_to_ptr.hbm [resolvable:$true] %s403
      %406 = dma.vmem_to_hbm [thread:$0]  %s402, 128, %s404, [#allocation12]
    $region45: #{tpu_custom_call.1} parent=1 // pred_fallthru
      _
    // Predicated region
    $region46: #{tpu_custom_call.1} parent=1 // pred_check
      _
    $region47: #{tpu_custom_call.1} parent=1 // pred_check_branch
      %408 = sbr.rel (0) target = $region49
    $region48: #{tpu_custom_call.1} parent=1 // pred_region
      %410 = vsyncadd [#allocation15], 0
      %s412 = sshll.u32 [#allocation14], 4
      %s413 = int_to_ptr.vmem [resolvable:$true] %s412
      %s414 = sshll.u32 %s7, 4
      %s415 = int_to_ptr.hbm [resolvable:$true] %s414
      %417 = dma.vmem_to_hbm [thread:$0]  %s413, 128, %s415, [#allocation15]
    $region49: #{tpu_custom_call.1} parent=1 // pred_fallthru
      _
    // Predicated region
    $region50: #{tpu_custom_call.1} parent=1 // pred_check
      _
    $region51: #{tpu_custom_call.1} parent=1 // pred_check_branch
      %419 = sbr.rel (0) target = $region53
    $region52: #{tpu_custom_call.1} parent=1 // pred_region
      %421 = dma.done [#allocation4], 1024
    $region53: #{tpu_custom_call.1} parent=1 // pred_fallthru
      _
    // Predicated region
    $region54: #{tpu_custom_call.1} parent=1 // pred_check
      _
    $region55: #{tpu_custom_call.1} parent=1 // pred_check_branch
      %423 = sbr.rel (0) target = $region57
    $region56: #{tpu_custom_call.1} parent=1 // pred_region
      %425 = dma.done [#allocation12], 1024
    $region57: #{tpu_custom_call.1} parent=1 // pred_fallthru
      _
    // Predicated region
    $region58: #{tpu_custom_call.1} parent=1 // pred_check
      _
    $region59: #{tpu_custom_call.1} parent=1 // pred_check_branch
      %427 = sbr.rel (0) target = $region61
    $region60: #{tpu_custom_call.1} parent=1 // pred_region
      %429 = dma.done [#allocation12], 128
    $region61: #{tpu_custom_call.1} parent=1 // pred_fallthru
      _
    // Predicated region
    $region62: #{tpu_custom_call.1} parent=1 // pred_check
      _
    $region63: #{tpu_custom_call.1} parent=1 // pred_check_branch
      %431 = sbr.rel (0) target = $region65
    $region64: #{tpu_custom_call.1} parent=1 // pred_region
      %433 = dma.done [#allocation15], 128
    $region65: #{tpu_custom_call.1} parent=1 // pred_fallthru
      _
    %434 = vsyncpa [#allocation3], 1
    %435 = vsyncpa [#allocation6], 1
    %436 = vsyncpa [#allocation9], 1
    %437 = vsyncpa [#allocation4], 1
    %438 = vsyncpa [#allocation12], 1
    %439 = vsyncpa [#allocation15], 1

</llo_original>
